<compile_context>
chip_gen: v7x
topology: tpu7x:2x2x1
jax: 0.10.0
libtpu: 0.0.40
codegen_flags: <defaults>
</compile_context>

<pallas_src>
import functools

import jax
import jax.numpy as jnp
from jax.experimental import pallas as pl
from jax.experimental.pallas import tpu as pltpu


# ---------------- Pallas kernel (backward hot path) ----------------

def _neg_scale_kernel(lam_ref, g_ref, o_ref, *, upcast_f32: bool):
    # grad_in = -lambda * grad_out
    lam = lam_ref[0]                                   # f32 scalar from SMEM
    if upcast_f32:
        o_ref[...] = (g_ref[...].astype(jnp.float32) * (-lam)).astype(o_ref.dtype)
    else:
        # native-dtype multiply (bf16 on v6e/v7x): halves vreg pressure, no casts
        o_ref[...] = g_ref[...] * (-lam).astype(o_ref.dtype)


# ---------------- hardware / layout helpers ----------------

_FAST_PATH_BYTES = 256 * 1024            # below this, plain XLA beats a custom call
_PALLAS_DTYPES = frozenset(jnp.dtype(d) for d in (jnp.float32, jnp.bfloat16))
# per-generation target bytes for one block buffer (2 in + 2 out are live at once)
_GEN_TARGET_BYTES = {7: 6 << 20, 6: 6 << 20, 5: 3 << 20, 4: 3 << 20}
_DEFAULT_TARGET_BYTES = 4 << 20


@functools.lru_cache(maxsize=None)
def _tpu_generation() -> int:
    """Best-effort TPU generation from device_kind; default to v6e behaviour."""
    try:
        kind = jax.devices()[0].device_kind.lower()
    except Exception:  # pragma: no cover
        return 6
    for g in (7, 6, 5, 4):
        if str(g) in kind:
            return g
    return 6


def _sublane_multiple(dtype) -> int:
    # sub-32-bit dtypes pack along sublanes: f32 -> 8, bf16/f16 -> 16, int8/fp8 -> 32
    itemsize = jnp.dtype(dtype).itemsize
    return 8 * max(1, 4 // itemsize)


def _round_up(x: int, m: int) -> int:
    return -(-x // m) * m


def _lane_width(n: int) -> int:
    # widest lane-dense last dim (multiple of 128) dividing the element count
    for w in (8192, 4096, 2048, 1024, 512, 256, 128):
        if n % w == 0:
            return w
    return 0  # ragged: body/tail split


def _pick_row_tile(rows: int, lanes: int, dtype, gen: int) -> int:
    """Row-tile size: ~target-bytes blocks, sublane-aligned, v7x dual-TC aware."""
    sub = _sublane_multiple(dtype)
    itemsize = jnp.dtype(dtype).itemsize
    slab_bytes = rows * lanes * itemsize
    target = _GEN_TARGET_BYTES.get(gen, _DEFAULT_TARGET_BYTES)

    tr = max(sub, (target // (lanes * itemsize)) // sub * sub)

    if tr >= rows:
        # whole slab fits one target-size block
        if gen >= 7 and slab_bytes > (1 << 20) and rows >= 2 * sub:
            # split into 2 blocks so both v7x TensorCores get work on the parallel axis
            half = _round_up(-(-rows // 2), sub)
            if half < rows:
                return half
        return rows  # block_shape == full array dims is always legal

    if gen >= 7:
        # keep short grids even so the 2-TC split is balanced
        nblk = pl.cdiv(rows, tr)
        if nblk <= 8 and nblk % 2 == 1:
            nblk += 1
            tr2 = _round_up(-(-rows // nblk), sub)
            if sub <= tr2 < rows:
                tr = tr2
    return tr


# ---------------- XLA fallback (tiny / f64 / ragged tail) ----------------

def _xla_neg_scale(g, lam):
    # compute width follows the gradient dtype (f64 stays f64 under x64; bf16 goes via f32)
    ct = jnp.result_type(g.dtype, jnp.float32)
    return (g.astype(ct) * (-lam.astype(ct))).astype(g.dtype)


# ---------------- Pallas driver ----------------

def _run_neg_scale_2d(g2d, lam_f32_1):
    rows, lanes = g2d.shape
    gen = _tpu_generation()
    dtype = g2d.dtype
    itemsize = jnp.dtype(dtype).itemsize
    n = rows * lanes

    tr = _pick_row_tile(rows, lanes, dtype, gen)
    grid = (pl.cdiv(rows, tr),)

    # bf16 stays packed on v6e/v7x (native bf16 VALU); f32 compute everywhere else.
    upcast_f32 = not (jnp.dtype(dtype) == jnp.dtype(jnp.bfloat16) and gen >= 6)

    # VMEM budget: 2 in + 2 out double-buffered blocks + headroom. Sized against the
    # scoped limit (tightest: v7x 32 MiB default / 64 MiB physical per TC).
    target = _GEN_TARGET_BYTES.get(gen, _DEFAULT_TARGET_BYTES)
    vmem_limit = min(4 * target + (8 << 20), 48 << 20)

    return pl.pallas_call(
        functools.partial(_neg_scale_kernel, upcast_f32=upcast_f32),
        out_shape=jax.ShapeDtypeStruct(g2d.shape, dtype),
        grid_spec=pl.GridSpec(
            grid=grid,
            in_specs=[
                pl.BlockSpec(memory_space=pltpu.MemorySpace.SMEM),   # lambda, f32 (1,)
                pl.BlockSpec((tr, lanes), lambda i: (i, 0)),
            ],
            out_specs=pl.BlockSpec((tr, lanes), lambda i: (i, 0)),
        ),
        compiler_params=pltpu.CompilerParams(
            dimension_semantics=("parallel",),
            vmem_limit_bytes=vmem_limit,
        ),
        cost_estimate=pl.CostEstimate(
            flops=n, transcendentals=0, bytes_accessed=2 * n * itemsize),
        input_output_aliases={1: 0},   # donate gradient buffer -> in-place scale under jit
    )(lam_f32_1, g2d)


def _neg_scale(g, lam):
    """Compute -lam * g; Pallas streaming kernel on the hot path, XLA elsewhere."""
    n = g.size
    if n == 0:
        return g

    itemsize = jnp.dtype(g.dtype).itemsize
    # Small tensors / non-target dtypes (f64 under x64, f16, ints): fused XLA wins.
    if n * itemsize < _FAST_PATH_BYTES or jnp.dtype(g.dtype) not in _PALLAS_DTYPES:
        return _xla_neg_scale(g, lam)

    lanes = _lane_width(n)
    lam1 = lam.reshape(1)
    if lanes:
        g2d = g.reshape(n // lanes, lanes)            # free reshape: no copy, no pad
        return _run_neg_scale_2d(g2d, lam1).reshape(g.shape)

    # Ragged element count: Pallas kernel over the lane-aligned body (preserves
    # aliasing, 1 read + 1 write), tiny XLA op for the <128-element tail.
    lanes = 128
    n_body = (n // lanes) * lanes
    flat = jnp.ravel(g)
    body = _run_neg_scale_2d(flat[:n_body].reshape(n_body // lanes, lanes), lam1)
    tail = _xla_neg_scale(flat[n_body:], lam)
    return jnp.concatenate([body.reshape(-1), tail]).reshape(g.shape)


# ---------------- custom_vjp (GRL semantics) ----------------

@jax.custom_vjp
def _grl_core(x, lam):
    # Forward: identity. No kernel, no copy.
    return x


def _grl_fwd(x, lam):
    return x, lam


def _grl_bwd(lam, g):
    grad_x = _neg_scale(g, lam)
    return grad_x, jnp.zeros_like(lam)    # lambda is non-differentiable (PyTorch: None)


_grl_core.defvjp(_grl_fwd, _grl_bwd)


def gradient_reversal(x, lambda_grl=1.0):
    """GRL: identity forward, -lambda * grad backward. lambda may be a Python float or a
    traced/annealed jnp scalar; neither causes a kernel recompile."""
    lam = jnp.asarray(lambda_grl, dtype=jnp.float32)
    return _grl_core(x, lam)


class GradientReversalLayer:
    """JAX/Pallas equivalent of the PyTorch GradientReversalLayer."""

    def __init__(self, lambda_grl: float = 1.0):
        self.lambda_grl = lambda_grl

    def set_lambda(self, lambda_grl):
        self.lambda_grl = lambda_grl

    def __call__(self, x):
        return gradient_reversal(x, self.lambda_grl)


if __name__ == "__main__":
    key = jax.random.PRNGKey(0)
    k1, k2, k3, k4 = jax.random.split(key, 4)

    # 1) Spec-sized NCHW input (matches the PyTorch module's typical use).
    #    Forward is a pure identity; this small backward uses the XLA fast path.
    x = jax.random.normal(k1, (2, 4, 16, 16), dtype=jnp.float32)
    layer = GradientReversalLayer(lambda_grl=0.5)
    y = jax.block_until_ready(layer(x))
    assert y.shape == x.shape and y.dtype == x.dtype
    assert jnp.allclose(y, x), "forward must be identity"

    g = jax.block_until_ready(
        jax.grad(lambda inp: jnp.sum(gradient_reversal(inp, 0.5) * 2.0))(x))
    assert jnp.allclose(g, jnp.full_like(x, -1.0)), "backward must be -lambda*grad"

    # 2) Larger f32 gradient: exercises the Pallas streaming kernel (lane-dense slab).
    xb = jax.random.normal(k2, (2, 4, 128, 128), dtype=jnp.float32)
    gb = jax.block_until_ready(
        jax.grad(lambda inp: jnp.sum(gradient_reversal(inp, 0.7)))(xb))
    assert jnp.allclose(gb, jnp.full_like(xb, -0.7))

    # 3) bf16 gradient: Pallas kernel, native bf16 compute on v6e/v7x, f32 on v5e.
    xbf = jax.random.normal(k3, (2, 4, 128, 128), dtype=jnp.float32).astype(jnp.bfloat16)
    gbf = jax.block_until_ready(
        jax.grad(lambda inp: jnp.sum(gradient_reversal(inp, 1.25).astype(jnp.float32)))(xbf))
    assert jnp.allclose(gbf.astype(jnp.float32), jnp.full((2, 4, 128, 128), -1.25))

    # 4) Ragged element count (not a multiple of 128): Pallas body + XLA tail, no padding.
    xr = jax.random.normal(k4, (70001,), dtype=jnp.float32)
    gr = jax.block_until_ready(
        jax.grad(lambda inp: jnp.sum(gradient_reversal(inp, 2.0)))(xr))
    assert jnp.allclose(gr, jnp.full_like(xr, -2.0))

    # 5) Traced / annealed lambda: same compiled kernel, no shape-static retrace.
    lam_arr = jnp.float32(1.5)
    g2 = jax.block_until_ready(
        jax.grad(lambda inp: jnp.sum(gradient_reversal(inp, lam_arr)))(xb))
    assert jnp.allclose(g2, jnp.full_like(xb, -1.5))

    print("KERNEL_OK")
</pallas_src>

<mosaic_0001>
module attributes {stable_mosaic.version = 11 : i64} {
  func.func @_neg_scale_kernel(%arg0: i32, %arg1: memref<1xf32, #tpu.memory_space<smem>>, %arg2: memref<16x8192xf32, #tpu.memory_space<vmem>>, %arg3: memref<16x8192xf32, #tpu.memory_space<vmem>>) attributes {dimension_semantics = [#tpu.dimension_semantics<parallel>], iteration_bounds = array<i64: 1>, scalar_prefetch = 0 : i64, scratch_operands = 0 : i64, tpu.core_type = #tpu.core_type<tc>, window_params = [{transform_indices = @transform_0, window_bounds = array<i64: 1>}, {transform_indices = @transform_1, window_bounds = array<i64: 16, 8192>}, {transform_indices = @transform_2, window_bounds = array<i64: 16, 8192>}]} {
    %c0 = arith.constant 0 : index
    %0 = memref.load %arg1[%c0] : memref<1xf32, #tpu.memory_space<smem>>
    %c0_0 = arith.constant 0 : index
    %c0_1 = arith.constant 0 : index
    %1 = vector.load %arg2[%c0_0, %c0_1] : memref<16x8192xf32, #tpu.memory_space<vmem>>, vector<16x8192xf32>
    %cst = arith.constant 0.000000e+00 : f32
    %2 = arith.subf %cst, %0 : f32
    %3 = vector.broadcast %2 : f32 to vector<16x8192xf32>
    %4 = arith.mulf %1, %3 : vector<16x8192xf32>
    %c0_2 = arith.constant 0 : index
    %c0_3 = arith.constant 0 : index
    %5 = vector.load %arg3[%c0_2, %c0_3] : memref<16x8192xf32, #tpu.memory_space<vmem>>, vector<16x8192xf32>
    tpu.vector_store %arg3[%c0_2, %c0_3], %4 {strides = array<i32>} : memref<16x8192xf32, #tpu.memory_space<vmem>>, vector<16x8192xf32>,
    return
  }
  func.func @transform_0(%arg0: i32) -> i32 {
    %c0_i32 = arith.constant 0 : i32
    %c0_i32_0 = arith.constant 0 : i32
    return %c0_i32 : i32
  }
  func.func @transform_1(%arg0: i32) -> (i32, i32) {
    %c0_i32 = arith.constant 0 : i32
    %c0_i32_0 = arith.constant 0 : i32
    return %arg0, %c0_i32 : i32, i32
  }
  func.func @transform_2(%arg0: i32) -> (i32, i32) {
    %c0_i32 = arith.constant 0 : i32
    %c0_i32_0 = arith.constant 0 : i32
    return %arg0, %c0_i32 : i32, i32
  }
}

</mosaic_0001>

<llo_original>
// kernel: tpu_custom_call.1
$region0: #{tpu_custom_call.1}
  #allocation0 [shape = 'u32[]', space=smem, size = 0x4, offset = 0x4, fixed_abs, tag = 'smem constant byte address 0x4 - core index']
  #allocation1 [shape = 'u32[144,128]{1,0:T(1,128)}', space=vmem, size = 0x12000, scoped, tag = 'internal scratch']
  #allocation2 [shape = 'f32[1]{0:T(128)S(6)}', space=smem, size = 0x200, scoped, tag = 'scoped memory for tpu_custom_call.1']
  %s0 = inlined_call_operand.<no memory space> [shape: f32[1], index: 0, kind: input, shape index: {}]
  %s1 = inlined_call_operand.hbm [shape: f32[16,8192], index: 1, kind: input, shape index: {}, may-alias: {1,2}]
  %s2 = inlined_call_operand.hbm [shape: f32[16,8192], index: 2, kind: output, shape index: {}, may-alias: {1,2}]
  %s3 = sld [smem:[#allocation0]]
  $region22: #{tpu_custom_call.1} parent=0
    _
  %s5 = ssub.s32 1, %s3
  %s6 = scalar_select 0, %s5, %s3
  %7 = sst [smem:[#allocation2]] %s0
  $region1: #{tpu_custom_call.1} parent=0
    #allocation3 [shape = 'u8[524288]{0}', space=vmem, size = 0x80000, scoped, tag = 'input window, operand 1, single buffered']
    #allocation4 [shape = 's32[1]{0}', space=sflag, size = 0x4, scoped, tag = 'scoped memory for tpu_custom_call.1']
    #allocation5 [shape = 's32[1]{0}', space=sflag, size = 0x4, scoped, tag = 'scoped memory for tpu_custom_call.1']
    #allocation6 [shape = 'u8[524288]{0}', space=vmem, size = 0x80000, scoped, tag = 'output window, operand 0, single buffered']
    %8 = vsyncpa [#allocation4], 0
    %9 = vsyncpa [#allocation5], 0
    // Predicated region
    $region2: #{tpu_custom_call.1} parent=1 // pred_check
      _
    $region3: #{tpu_custom_call.1} parent=1 // pred_check_branch
      %11 = sbr.rel (0) target = $region5
    $region4: #{tpu_custom_call.1} parent=1 // pred_region
      _
    $region5: #{tpu_custom_call.1} parent=1 // pred_fallthru
      _
    // Predicated region
    $region6: #{tpu_custom_call.1} parent=1 // pred_check
      _
    $region7: #{tpu_custom_call.1} parent=1 // pred_check_branch
      %13 = sbr.rel (0) target = $region9
    $region8: #{tpu_custom_call.1} parent=1 // pred_region
      %s15 = ssub.s32 16384, 16384
      %16 = vsyncadd [#allocation4], %s15
      %s17 = sshll.u32 [#allocation3], 4
      %s18 = int_to_ptr.vmem [resolvable:$true] %s17
      %23 = dma.hbm_to_vmem [thread:$0]  %s1, 16384, %s18, [#allocation4], 8192, 8192, 512
    $region9: #{tpu_custom_call.1} parent=1 // pred_fallthru
      _
    // Predicated region
    $region10: #{tpu_custom_call.1} parent=1 // pred_check
      _
    $region11: #{tpu_custom_call.1} parent=1 // pred_check_branch
      %25 = sbr.rel (0) target = $region13
    $region12: #{tpu_custom_call.1} parent=1 // pred_region
      %26 = dma.done [#allocation4], 16384
    $region13: #{tpu_custom_call.1} parent=1 // pred_fallthru
      _
    %s27 = sld [smem:[#allocation2]]
    %v28 = vld [vmem:[#allocation3] sm:$0xff]
    %v29 = vld [vmem:[#allocation3 + $0x8] sm:$0xff]
    %v30 = vld [vmem:[#allocation3 + $0x10] sm:$0xff]
    %v31 = vld [vmem:[#allocation3 + $0x18] sm:$0xff]
    %v32 = vld [vmem:[#allocation3 + $0x20] sm:$0xff]
    %v33 = vld [vmem:[#allocation3 + $0x28] sm:$0xff]
    %v34 = vld [vmem:[#allocation3 + $0x30] sm:$0xff]
    %v35 = vld [vmem:[#allocation3 + $0x38] sm:$0xff]
    %v36 = vld [vmem:[#allocation3 + $0x40] sm:$0xff]
    %v37 = vld [vmem:[#allocation3 + $0x48] sm:$0xff]
    %v38 = vld [vmem:[#allocation3 + $0x50] sm:$0xff]
    %v39 = vld [vmem:[#allocation3 + $0x58] sm:$0xff]
    %v40 = vld [vmem:[#allocation3 + $0x60] sm:$0xff]
    %v41 = vld [vmem:[#allocation3 + $0x68] sm:$0xff]
    %v42 = vld [vmem:[#allocation3 + $0x70] sm:$0xff]
    %v43 = vld [vmem:[#allocation3 + $0x78] sm:$0xff]
    %v44 = vld [vmem:[#allocation3 + $0x80] sm:$0xff]
    %v45 = vld [vmem:[#allocation3 + $0x88] sm:$0xff]
    %v46 = vld [vmem:[#allocation3 + $0x90] sm:$0xff]
    %v47 = vld [vmem:[#allocation3 + $0x98] sm:$0xff]
    %v48 = vld [vmem:[#allocation3 + $0xa0] sm:$0xff]
    %v49 = vld [vmem:[#allocation3 + $0xa8] sm:$0xff]
    %v50 = vld [vmem:[#allocation3 + $0xb0] sm:$0xff]
    %v51 = vld [vmem:[#allocation3 + $0xb8] sm:$0xff]
    %v52 = vld [vmem:[#allocation3 + $0xc0] sm:$0xff]
    %v53 = vld [vmem:[#allocation3 + $0xc8] sm:$0xff]
    %v54 = vld [vmem:[#allocation3 + $0xd0] sm:$0xff]
    %v55 = vld [vmem:[#allocation3 + $0xd8] sm:$0xff]
    %v56 = vld [vmem:[#allocation3 + $0xe0] sm:$0xff]
    %v57 = vld [vmem:[#allocation3 + $0xe8] sm:$0xff]
    %v58 = vld [vmem:[#allocation3 + $0xf0] sm:$0xff]
    %v59 = vld [vmem:[#allocation3 + $0xf8] sm:$0xff]
    %v60 = vld [vmem:[#allocation3 + $0x100] sm:$0xff]
    %v61 = vld [vmem:[#allocation3 + $0x108] sm:$0xff]
    %v62 = vld [vmem:[#allocation3 + $0x110] sm:$0xff]
    %v63 = vld [vmem:[#allocation3 + $0x118] sm:$0xff]
    %v64 = vld [vmem:[#allocation3 + $0x120] sm:$0xff]
    %v65 = vld [vmem:[#allocation3 + $0x128] sm:$0xff]
    %v66 = vld [vmem:[#allocation3 + $0x130] sm:$0xff]
    %v67 = vld [vmem:[#allocation3 + $0x138] sm:$0xff]
    %v68 = vld [vmem:[#allocation3 + $0x140] sm:$0xff]
    %v69 = vld [vmem:[#allocation3 + $0x148] sm:$0xff]
    %v70 = vld [vmem:[#allocation3 + $0x150] sm:$0xff]
    %v71 = vld [vmem:[#allocation3 + $0x158] sm:$0xff]
    %v72 = vld [vmem:[#allocation3 + $0x160] sm:$0xff]
    %v73 = vld [vmem:[#allocation3 + $0x168] sm:$0xff]
    %v74 = vld [vmem:[#allocation3 + $0x170] sm:$0xff]
    %v75 = vld [vmem:[#allocation3 + $0x178] sm:$0xff]
    %v76 = vld [vmem:[#allocation3 + $0x180] sm:$0xff]
    %v77 = vld [vmem:[#allocation3 + $0x188] sm:$0xff]
    %v78 = vld [vmem:[#allocation3 + $0x190] sm:$0xff]
    %v79 = vld [vmem:[#allocation3 + $0x198] sm:$0xff]
    %v80 = vld [vmem:[#allocation3 + $0x1a0] sm:$0xff]
    %v81 = vld [vmem:[#allocation3 + $0x1a8] sm:$0xff]
    %v82 = vld [vmem:[#allocation3 + $0x1b0] sm:$0xff]
    %v83 = vld [vmem:[#allocation3 + $0x1b8] sm:$0xff]
    %v84 = vld [vmem:[#allocation3 + $0x1c0] sm:$0xff]
    %v85 = vld [vmem:[#allocation3 + $0x1c8] sm:$0xff]
    %v86 = vld [vmem:[#allocation3 + $0x1d0] sm:$0xff]
    %v87 = vld [vmem:[#allocation3 + $0x1d8] sm:$0xff]
    %v88 = vld [vmem:[#allocation3 + $0x1e0] sm:$0xff]
    %v89 = vld [vmem:[#allocation3 + $0x1e8] sm:$0xff]
    %v90 = vld [vmem:[#allocation3 + $0x1f0] sm:$0xff]
    %v91 = vld [vmem:[#allocation3 + $0x1f8] sm:$0xff]
    %v92 = vld [vmem:[#allocation3 + $0x200] sm:$0xff]
    %v93 = vld [vmem:[#allocation3 + $0x208] sm:$0xff]
    %v94 = vld [vmem:[#allocation3 + $0x210] sm:$0xff]
    %v95 = vld [vmem:[#allocation3 + $0x218] sm:$0xff]
    %v96 = vld [vmem:[#allocation3 + $0x220] sm:$0xff]
    %v97 = vld [vmem:[#allocation3 + $0x228] sm:$0xff]
    %v98 = vld [vmem:[#allocation3 + $0x230] sm:$0xff]
    %v99 = vld [vmem:[#allocation3 + $0x238] sm:$0xff]
    %v100 = vld [vmem:[#allocation3 + $0x240] sm:$0xff]
    %v101 = vld [vmem:[#allocation3 + $0x248] sm:$0xff]
    %v102 = vld [vmem:[#allocation3 + $0x250] sm:$0xff]
    %v103 = vld [vmem:[#allocation3 + $0x258] sm:$0xff]
    %v104 = vld [vmem:[#allocation3 + $0x260] sm:$0xff]
    %v105 = vld [vmem:[#allocation3 + $0x268] sm:$0xff]
    %v106 = vld [vmem:[#allocation3 + $0x270] sm:$0xff]
    %v107 = vld [vmem:[#allocation3 + $0x278] sm:$0xff]
    %v108 = vld [vmem:[#allocation3 + $0x280] sm:$0xff]
    %v109 = vld [vmem:[#allocation3 + $0x288] sm:$0xff]
    %v110 = vld [vmem:[#allocation3 + $0x290] sm:$0xff]
    %v111 = vld [vmem:[#allocation3 + $0x298] sm:$0xff]
    %v112 = vld [vmem:[#allocation3 + $0x2a0] sm:$0xff]
    %v113 = vld [vmem:[#allocation3 + $0x2a8] sm:$0xff]
    %v114 = vld [vmem:[#allocation3 + $0x2b0] sm:$0xff]
    %v115 = vld [vmem:[#allocation3 + $0x2b8] sm:$0xff]
    %v116 = vld [vmem:[#allocation3 + $0x2c0] sm:$0xff]
    %v117 = vld [vmem:[#allocation3 + $0x2c8] sm:$0xff]
    %v118 = vld [vmem:[#allocation3 + $0x2d0] sm:$0xff]
    %v119 = vld [vmem:[#allocation3 + $0x2d8] sm:$0xff]
    %v120 = vld [vmem:[#allocation3 + $0x2e0] sm:$0xff]
    %v121 = vld [vmem:[#allocation3 + $0x2e8] sm:$0xff]
    %v122 = vld [vmem:[#allocation3 + $0x2f0] sm:$0xff]
    %v123 = vld [vmem:[#allocation3 + $0x2f8] sm:$0xff]
    %v124 = vld [vmem:[#allocation3 + $0x300] sm:$0xff]
    %v125 = vld [vmem:[#allocation3 + $0x308] sm:$0xff]
    %v126 = vld [vmem:[#allocation3 + $0x310] sm:$0xff]
    %v127 = vld [vmem:[#allocation3 + $0x318] sm:$0xff]
    %v128 = vld [vmem:[#allocation3 + $0x320] sm:$0xff]
    %v129 = vld [vmem:[#allocation3 + $0x328] sm:$0xff]
    %v130 = vld [vmem:[#allocation3 + $0x330] sm:$0xff]
    %v131 = vld [vmem:[#allocation3 + $0x338] sm:$0xff]
    %v132 = vld [vmem:[#allocation3 + $0x340] sm:$0xff]
    %v133 = vld [vmem:[#allocation3 + $0x348] sm:$0xff]
    %v134 = vld [vmem:[#allocation3 + $0x350] sm:$0xff]
    %v135 = vld [vmem:[#allocation3 + $0x358] sm:$0xff]
    %v136 = vld [vmem:[#allocation3 + $0x360] sm:$0xff]
    %v137 = vld [vmem:[#allocation3 + $0x368] sm:$0xff]
    %v138 = vld [vmem:[#allocation3 + $0x370] sm:$0xff]
    %v139 = vld [vmem:[#allocation3 + $0x378] sm:$0xff]
    %v140 = vld [vmem:[#allocation3 + $0x380] sm:$0xff]
    %v141 = vld [vmem:[#allocation3 + $0x388] sm:$0xff]
    %v142 = vld [vmem:[#allocation3 + $0x390] sm:$0xff]
    %v143 = vld [vmem:[#allocation3 + $0x398] sm:$0xff]
    %v144 = vld [vmem:[#allocation3 + $0x3a0] sm:$0xff]
    %v145 = vld [vmem:[#allocation3 + $0x3a8] sm:$0xff]
    %v146 = vld [vmem:[#allocation3 + $0x3b0] sm:$0xff]
    %v147 = vld [vmem:[#allocation3 + $0x3b8] sm:$0xff]
    %v148 = vld [vmem:[#allocation3 + $0x3c0] sm:$0xff]
    %v149 = vld [vmem:[#allocation3 + $0x3c8] sm:$0xff]
    %v150 = vld [vmem:[#allocation3 + $0x3d0] sm:$0xff]
    %v151 = vld [vmem:[#allocation3 + $0x3d8] sm:$0xff]
    %v152 = vld [vmem:[#allocation3 + $0x3e0] sm:$0xff]
    %v153 = vld [vmem:[#allocation3 + $0x3e8] sm:$0xff]
    %v154 = vld [vmem:[#allocation3 + $0x3f0] sm:$0xff]
    %v155 = vld [vmem:[#allocation3 + $0x3f8] sm:$0xff]
    %s156 = ssub.f32 0.0, %s27
    %v157 = vstv %s156
    %v158 = vmul.f32 %v28, %v157
    %v159 = vmul.f32 %v29, %v157
    %v160 = vmul.f32 %v30, %v157
    %v161 = vmul.f32 %v31, %v157
    %v162 = vmul.f32 %v32, %v157
    %v163 = vmul.f32 %v33, %v157
    %v164 = vmul.f32 %v34, %v157
    %v165 = vmul.f32 %v35, %v157
    %v166 = vmul.f32 %v36, %v157
    %v167 = vmul.f32 %v37, %v157
    %v168 = vmul.f32 %v38, %v157
    %v169 = vmul.f32 %v39, %v157
    %v170 = vmul.f32 %v40, %v157
    %v171 = vmul.f32 %v41, %v157
    %v172 = vmul.f32 %v42, %v157
    %v173 = vmul.f32 %v43, %v157
    %v174 = vmul.f32 %v44, %v157
    %v175 = vmul.f32 %v45, %v157
    %v176 = vmul.f32 %v46, %v157
    %v177 = vmul.f32 %v47, %v157
    %v178 = vmul.f32 %v48, %v157
    %v179 = vmul.f32 %v49, %v157
    %v180 = vmul.f32 %v50, %v157
    %v181 = vmul.f32 %v51, %v157
    %v182 = vmul.f32 %v52, %v157
    %v183 = vmul.f32 %v53, %v157
    %v184 = vmul.f32 %v54, %v157
    %v185 = vmul.f32 %v55, %v157
    %v186 = vmul.f32 %v56, %v157
    %v187 = vmul.f32 %v57, %v157
    %v188 = vmul.f32 %v58, %v157
    %v189 = vmul.f32 %v59, %v157
    %v190 = vmul.f32 %v60, %v157
    %v191 = vmul.f32 %v61, %v157
    %v192 = vmul.f32 %v62, %v157
    %v193 = vmul.f32 %v63, %v157
    %v194 = vmul.f32 %v64, %v157
    %v195 = vmul.f32 %v65, %v157
    %v196 = vmul.f32 %v66, %v157
    %v197 = vmul.f32 %v67, %v157
    %v198 = vmul.f32 %v68, %v157
    %v199 = vmul.f32 %v69, %v157
    %v200 = vmul.f32 %v70, %v157
    %v201 = vmul.f32 %v71, %v157
    %v202 = vmul.f32 %v72, %v157
    %v203 = vmul.f32 %v73, %v157
    %v204 = vmul.f32 %v74, %v157
    %v205 = vmul.f32 %v75, %v157
    %v206 = vmul.f32 %v76, %v157
    %v207 = vmul.f32 %v77, %v157
    %v208 = vmul.f32 %v78, %v157
    %v209 = vmul.f32 %v79, %v157
    %v210 = vmul.f32 %v80, %v157
    %v211 = vmul.f32 %v81, %v157
    %v212 = vmul.f32 %v82, %v157
    %v213 = vmul.f32 %v83, %v157
    %v214 = vmul.f32 %v84, %v157
    %v215 = vmul.f32 %v85, %v157
    %v216 = vmul.f32 %v86, %v157
    %v217 = vmul.f32 %v87, %v157
    %v218 = vmul.f32 %v88, %v157
    %v219 = vmul.f32 %v89, %v157
    %v220 = vmul.f32 %v90, %v157
    %v221 = vmul.f32 %v91, %v157
    %v222 = vmul.f32 %v92, %v157
    %v223 = vmul.f32 %v93, %v157
    %v224 = vmul.f32 %v94, %v157
    %v225 = vmul.f32 %v95, %v157
    %v226 = vmul.f32 %v96, %v157
    %v227 = vmul.f32 %v97, %v157
    %v228 = vmul.f32 %v98, %v157
    %v229 = vmul.f32 %v99, %v157
    %v230 = vmul.f32 %v100, %v157
    %v231 = vmul.f32 %v101, %v157
    %v232 = vmul.f32 %v102, %v157
    %v233 = vmul.f32 %v103, %v157
    %v234 = vmul.f32 %v104, %v157
    %v235 = vmul.f32 %v105, %v157
    %v236 = vmul.f32 %v106, %v157
    %v237 = vmul.f32 %v107, %v157
    %v238 = vmul.f32 %v108, %v157
    %v239 = vmul.f32 %v109, %v157
    %v240 = vmul.f32 %v110, %v157
    %v241 = vmul.f32 %v111, %v157
    %v242 = vmul.f32 %v112, %v157
    %v243 = vmul.f32 %v113, %v157
    %v244 = vmul.f32 %v114, %v157
    %v245 = vmul.f32 %v115, %v157
    %v246 = vmul.f32 %v116, %v157
    %v247 = vmul.f32 %v117, %v157
    %v248 = vmul.f32 %v118, %v157
    %v249 = vmul.f32 %v119, %v157
    %v250 = vmul.f32 %v120, %v157
    %v251 = vmul.f32 %v121, %v157
    %v252 = vmul.f32 %v122, %v157
    %v253 = vmul.f32 %v123, %v157
    %v254 = vmul.f32 %v124, %v157
    %v255 = vmul.f32 %v125, %v157
    %v256 = vmul.f32 %v126, %v157
    %v257 = vmul.f32 %v127, %v157
    %v258 = vmul.f32 %v128, %v157
    %v259 = vmul.f32 %v129, %v157
    %v260 = vmul.f32 %v130, %v157
    %v261 = vmul.f32 %v131, %v157
    %v262 = vmul.f32 %v132, %v157
    %v263 = vmul.f32 %v133, %v157
    %v264 = vmul.f32 %v134, %v157
    %v265 = vmul.f32 %v135, %v157
    %v266 = vmul.f32 %v136, %v157
    %v267 = vmul.f32 %v137, %v157
    %v268 = vmul.f32 %v138, %v157
    %v269 = vmul.f32 %v139, %v157
    %v270 = vmul.f32 %v140, %v157
    %v271 = vmul.f32 %v141, %v157
    %v272 = vmul.f32 %v142, %v157
    %v273 = vmul.f32 %v143, %v157
    %v274 = vmul.f32 %v144, %v157
    %v275 = vmul.f32 %v145, %v157
    %v276 = vmul.f32 %v146, %v157
    %v277 = vmul.f32 %v147, %v157
    %v278 = vmul.f32 %v148, %v157
    %v279 = vmul.f32 %v149, %v157
    %v280 = vmul.f32 %v150, %v157
    %v281 = vmul.f32 %v151, %v157
    %v282 = vmul.f32 %v152, %v157
    %v283 = vmul.f32 %v153, %v157
    %v284 = vmul.f32 %v154, %v157
    %v285 = vmul.f32 %v155, %v157
    %286 = vst [vmem:[#allocation6] sm:$0xff] %v158
    %287 = vst [vmem:[#allocation6 + $0x8] sm:$0xff] %v159
    %288 = vst [vmem:[#allocation6 + $0x10] sm:$0xff] %v160
    %289 = vst [vmem:[#allocation6 + $0x18] sm:$0xff] %v161
    %290 = vst [vmem:[#allocation6 + $0x20] sm:$0xff] %v162
    %291 = vst [vmem:[#allocation6 + $0x28] sm:$0xff] %v163
    %292 = vst [vmem:[#allocation6 + $0x30] sm:$0xff] %v164
    %293 = vst [vmem:[#allocation6 + $0x38] sm:$0xff] %v165
    %294 = vst [vmem:[#allocation6 + $0x40] sm:$0xff] %v166
    %295 = vst [vmem:[#allocation6 + $0x48] sm:$0xff] %v167
    %296 = vst [vmem:[#allocation6 + $0x50] sm:$0xff] %v168
    %297 = vst [vmem:[#allocation6 + $0x58] sm:$0xff] %v169
    %298 = vst [vmem:[#allocation6 + $0x60] sm:$0xff] %v170
    %299 = vst [vmem:[#allocation6 + $0x68] sm:$0xff] %v171
    %300 = vst [vmem:[#allocation6 + $0x70] sm:$0xff] %v172
    %301 = vst [vmem:[#allocation6 + $0x78] sm:$0xff] %v173
    %302 = vst [vmem:[#allocation6 + $0x80] sm:$0xff] %v174
    %303 = vst [vmem:[#allocation6 + $0x88] sm:$0xff] %v175
    %304 = vst [vmem:[#allocation6 + $0x90] sm:$0xff] %v176
    %305 = vst [vmem:[#allocation6 + $0x98] sm:$0xff] %v177
    %306 = vst [vmem:[#allocation6 + $0xa0] sm:$0xff] %v178
    %307 = vst [vmem:[#allocation6 + $0xa8] sm:$0xff] %v179
    %308 = vst [vmem:[#allocation6 + $0xb0] sm:$0xff] %v180
    %309 = vst [vmem:[#allocation6 + $0xb8] sm:$0xff] %v181
    %310 = vst [vmem:[#allocation6 + $0xc0] sm:$0xff] %v182
    %311 = vst [vmem:[#allocation6 + $0xc8] sm:$0xff] %v183
    %312 = vst [vmem:[#allocation6 + $0xd0] sm:$0xff] %v184
    %313 = vst [vmem:[#allocation6 + $0xd8] sm:$0xff] %v185
    %314 = vst [vmem:[#allocation6 + $0xe0] sm:$0xff] %v186
    %315 = vst [vmem:[#allocation6 + $0xe8] sm:$0xff] %v187
    %316 = vst [vmem:[#allocation6 + $0xf0] sm:$0xff] %v188
    %317 = vst [vmem:[#allocation6 + $0xf8] sm:$0xff] %v189
    %318 = vst [vmem:[#allocation6 + $0x100] sm:$0xff] %v190
    %319 = vst [vmem:[#allocation6 + $0x108] sm:$0xff] %v191
    %320 = vst [vmem:[#allocation6 + $0x110] sm:$0xff] %v192
    %321 = vst [vmem:[#allocation6 + $0x118] sm:$0xff] %v193
    %322 = vst [vmem:[#allocation6 + $0x120] sm:$0xff] %v194
    %323 = vst [vmem:[#allocation6 + $0x128] sm:$0xff] %v195
    %324 = vst [vmem:[#allocation6 + $0x130] sm:$0xff] %v196
    %325 = vst [vmem:[#allocation6 + $0x138] sm:$0xff] %v197
    %326 = vst [vmem:[#allocation6 + $0x140] sm:$0xff] %v198
    %327 = vst [vmem:[#allocation6 + $0x148] sm:$0xff] %v199
    %328 = vst [vmem:[#allocation6 + $0x150] sm:$0xff] %v200
    %329 = vst [vmem:[#allocation6 + $0x158] sm:$0xff] %v201
    %330 = vst [vmem:[#allocation6 + $0x160] sm:$0xff] %v202
    %331 = vst [vmem:[#allocation6 + $0x168] sm:$0xff] %v203
    %332 = vst [vmem:[#allocation6 + $0x170] sm:$0xff] %v204
    %333 = vst [vmem:[#allocation6 + $0x178] sm:$0xff] %v205
    %334 = vst [vmem:[#allocation6 + $0x180] sm:$0xff] %v206
    %335 = vst [vmem:[#allocation6 + $0x188] sm:$0xff] %v207
    %336 = vst [vmem:[#allocation6 + $0x190] sm:$0xff] %v208
    %337 = vst [vmem:[#allocation6 + $0x198] sm:$0xff] %v209
    %338 = vst [vmem:[#allocation6 + $0x1a0] sm:$0xff] %v210
    %339 = vst [vmem:[#allocation6 + $0x1a8] sm:$0xff] %v211
    %340 = vst [vmem:[#allocation6 + $0x1b0] sm:$0xff] %v212
    %341 = vst [vmem:[#allocation6 + $0x1b8] sm:$0xff] %v213
    %342 = vst [vmem:[#allocation6 + $0x1c0] sm:$0xff] %v214
    %343 = vst [vmem:[#allocation6 + $0x1c8] sm:$0xff] %v215
    %344 = vst [vmem:[#allocation6 + $0x1d0] sm:$0xff] %v216
    %345 = vst [vmem:[#allocation6 + $0x1d8] sm:$0xff] %v217
    %346 = vst [vmem:[#allocation6 + $0x1e0] sm:$0xff] %v218
    %347 = vst [vmem:[#allocation6 + $0x1e8] sm:$0xff] %v219
    %348 = vst [vmem:[#allocation6 + $0x1f0] sm:$0xff] %v220
    %349 = vst [vmem:[#allocation6 + $0x1f8] sm:$0xff] %v221
    %350 = vst [vmem:[#allocation6 + $0x200] sm:$0xff] %v222
    %351 = vst [vmem:[#allocation6 + $0x208] sm:$0xff] %v223
    %352 = vst [vmem:[#allocation6 + $0x210] sm:$0xff] %v224
    %353 = vst [vmem:[#allocation6 + $0x218] sm:$0xff] %v225
    %354 = vst [vmem:[#allocation6 + $0x220] sm:$0xff] %v226
    %355 = vst [vmem:[#allocation6 + $0x228] sm:$0xff] %v227
    %356 = vst [vmem:[#allocation6 + $0x230] sm:$0xff] %v228
    %357 = vst [vmem:[#allocation6 + $0x238] sm:$0xff] %v229
    %358 = vst [vmem:[#allocation6 + $0x240] sm:$0xff] %v230
    %359 = vst [vmem:[#allocation6 + $0x248] sm:$0xff] %v231
    %360 = vst [vmem:[#allocation6 + $0x250] sm:$0xff] %v232
    %361 = vst [vmem:[#allocation6 + $0x258] sm:$0xff] %v233
    %362 = vst [vmem:[#allocation6 + $0x260] sm:$0xff] %v234
    %363 = vst [vmem:[#allocation6 + $0x268] sm:$0xff] %v235
    %364 = vst [vmem:[#allocation6 + $0x270] sm:$0xff] %v236
    %365 = vst [vmem:[#allocation6 + $0x278] sm:$0xff] %v237
    %366 = vst [vmem:[#allocation6 + $0x280] sm:$0xff] %v238
    %367 = vst [vmem:[#allocation6 + $0x288] sm:$0xff] %v239
    %368 = vst [vmem:[#allocation6 + $0x290] sm:$0xff] %v240
    %369 = vst [vmem:[#allocation6 + $0x298] sm:$0xff] %v241
    %370 = vst [vmem:[#allocation6 + $0x2a0] sm:$0xff] %v242
    %371 = vst [vmem:[#allocation6 + $0x2a8] sm:$0xff] %v243
    %372 = vst [vmem:[#allocation6 + $0x2b0] sm:$0xff] %v244
    %373 = vst [vmem:[#allocation6 + $0x2b8] sm:$0xff] %v245
    %374 = vst [vmem:[#allocation6 + $0x2c0] sm:$0xff] %v246
    %375 = vst [vmem:[#allocation6 + $0x2c8] sm:$0xff] %v247
    %376 = vst [vmem:[#allocation6 + $0x2d0] sm:$0xff] %v248
    %377 = vst [vmem:[#allocation6 + $0x2d8] sm:$0xff] %v249
    %378 = vst [vmem:[#allocation6 + $0x2e0] sm:$0xff] %v250
    %379 = vst [vmem:[#allocation6 + $0x2e8] sm:$0xff] %v251
    %380 = vst [vmem:[#allocation6 + $0x2f0] sm:$0xff] %v252
    %381 = vst [vmem:[#allocation6 + $0x2f8] sm:$0xff] %v253
    %382 = vst [vmem:[#allocation6 + $0x300] sm:$0xff] %v254
    %383 = vst [vmem:[#allocation6 + $0x308] sm:$0xff] %v255
    %384 = vst [vmem:[#allocation6 + $0x310] sm:$0xff] %v256
    %385 = vst [vmem:[#allocation6 + $0x318] sm:$0xff] %v257
    %386 = vst [vmem:[#allocation6 + $0x320] sm:$0xff] %v258
    %387 = vst [vmem:[#allocation6 + $0x328] sm:$0xff] %v259
    %388 = vst [vmem:[#allocation6 + $0x330] sm:$0xff] %v260
    %389 = vst [vmem:[#allocation6 + $0x338] sm:$0xff] %v261
    %390 = vst [vmem:[#allocation6 + $0x340] sm:$0xff] %v262
    %391 = vst [vmem:[#allocation6 + $0x348] sm:$0xff] %v263
    %392 = vst [vmem:[#allocation6 + $0x350] sm:$0xff] %v264
    %393 = vst [vmem:[#allocation6 + $0x358] sm:$0xff] %v265
    %394 = vst [vmem:[#allocation6 + $0x360] sm:$0xff] %v266
    %395 = vst [vmem:[#allocation6 + $0x368] sm:$0xff] %v267
    %396 = vst [vmem:[#allocation6 + $0x370] sm:$0xff] %v268
    %397 = vst [vmem:[#allocation6 + $0x378] sm:$0xff] %v269
    %398 = vst [vmem:[#allocation6 + $0x380] sm:$0xff] %v270
    %399 = vst [vmem:[#allocation6 + $0x388] sm:$0xff] %v271
    %400 = vst [vmem:[#allocation6 + $0x390] sm:$0xff] %v272
    %401 = vst [vmem:[#allocation6 + $0x398] sm:$0xff] %v273
    %402 = vst [vmem:[#allocation6 + $0x3a0] sm:$0xff] %v274
    %403 = vst [vmem:[#allocation6 + $0x3a8] sm:$0xff] %v275
    %404 = vst [vmem:[#allocation6 + $0x3b0] sm:$0xff] %v276
    %405 = vst [vmem:[#allocation6 + $0x3b8] sm:$0xff] %v277
    %406 = vst [vmem:[#allocation6 + $0x3c0] sm:$0xff] %v278
    %407 = vst [vmem:[#allocation6 + $0x3c8] sm:$0xff] %v279
    %408 = vst [vmem:[#allocation6 + $0x3d0] sm:$0xff] %v280
    %409 = vst [vmem:[#allocation6 + $0x3d8] sm:$0xff] %v281
    %410 = vst [vmem:[#allocation6 + $0x3e0] sm:$0xff] %v282
    %411 = vst [vmem:[#allocation6 + $0x3e8] sm:$0xff] %v283
    %412 = vst [vmem:[#allocation6 + $0x3f0] sm:$0xff] %v284
    %413 = vst [vmem:[#allocation6 + $0x3f8] sm:$0xff] %v285
    // Predicated region
    $region14: #{tpu_custom_call.1} parent=1 // pred_check
      _
    $region15: #{tpu_custom_call.1} parent=1 // pred_check_branch
      %415 = sbr.rel (0) target = $region17
    $region16: #{tpu_custom_call.1} parent=1 // pred_region
      %s417 = ssub.s32 16384, 16384
      %418 = vsyncadd [#allocation5], %s417
      %s419 = sshll.u32 [#allocation6], 4
      %s420 = int_to_ptr.vmem [resolvable:$true] %s419
      %425 = dma.vmem_to_hbm [thread:$0]  %s420, 16384, %s2, [#allocation5], 8192, 8192, 512
    $region17: #{tpu_custom_call.1} parent=1 // pred_fallthru
      _
    // Predicated region
    $region18: #{tpu_custom_call.1} parent=1 // pred_check
      _
    $region19: #{tpu_custom_call.1} parent=1 // pred_check_branch
      %427 = sbr.rel (0) target = $region21
    $region20: #{tpu_custom_call.1} parent=1 // pred_region
      %428 = dma.done [#allocation5], 16384
    $region21: #{tpu_custom_call.1} parent=1 // pred_fallthru
      _
    %429 = vsyncpa [#allocation4], 1
    %430 = vsyncpa [#allocation5], 1

</llo_original>
